<compile_context>
chip_gen: v7x
topology: tpu7x:2x2x1
jax: 0.10.0
libtpu: 0.0.40
codegen_flags: <defaults>
</compile_context>

<pallas_src>
import jax
import jax.numpy as jnp
from jax.experimental import pallas as pl
from jax.experimental.pallas import tpu as pltpu

FEAT = 128   # lane-aligned padded width for input features and hidden layers
HID = 64     # true hidden width of the Critic MLP


def _round_up(x, m):
    return ((x + m - 1) // m) * m


def critic_kernel(s_ref, w1_ref, w2_ref, aux_ref, out_ref):
    # aux rows: 0 = b1 (padded to 128), 1 = b2, 2 = fc3 weight row, 3 = [b3, 0...]
    aux = aux_ref[...]
    b1 = aux[0:1, :]          # (1, 128)
    b2 = aux[1:2, :]          # (1, 128)
    w3 = aux[2:3, :]          # (1, 128)
    b3 = aux[3:4, 0:1]        # (1, 1)

    # fc1 -> tanh  (padded columns stay exactly zero: zero weights + zero bias)
    x = jnp.tanh(
        jnp.dot(s_ref[...], w1_ref[...], preferred_element_type=jnp.float32) + b1
    )
    # fc2 -> tanh
    x = jnp.tanh(
        jnp.dot(x, w2_ref[...], preferred_element_type=jnp.float32) + b2
    )
    # fc3 value head: VPU multiply + lane reduction instead of an N=1 MXU matmul
    v = jnp.sum(x * w3, axis=-1, keepdims=True) + b3
    out_ref[...] = v.astype(out_ref.dtype)


def pack_params(w1, b1, w2, b2, w3, b3):
    """Pad weights to 128-lane tiles and pack biases + fc3 weight into one tile."""
    n_s = w1.shape[0]
    w1p = jnp.zeros((FEAT, FEAT), jnp.float32).at[:n_s, :HID].set(w1)
    w2p = jnp.zeros((FEAT, FEAT), jnp.float32).at[:HID, :HID].set(w2)
    aux = jnp.zeros((8, FEAT), jnp.float32)
    aux = aux.at[0, :HID].set(b1.reshape(-1))
    aux = aux.at[1, :HID].set(b2.reshape(-1))
    aux = aux.at[2, :HID].set(w3.reshape(-1))
    aux = aux.at[3, 0].set(b3.reshape(-1)[0])
    return w1p, w2p, aux


def critic_forward(s, packed_params, block_b=512):
    w1p, w2p, aux = packed_params
    B, n_s = s.shape

    # Batch tile: multiple of 8 sublanes, capped at block_b rows (f32 keeps the
    # double-buffered s/out tiles + resident weights well under 64 MiB VMEM).
    tb = min(block_b, _round_up(B, 8))
    Bp = _round_up(B, tb)

    # Zero-pad input to (Bp, 128): padded rows/cols contribute nothing real and
    # make every load/store a full unmasked tile.
    s_pad = jnp.zeros((Bp, FEAT), jnp.float32).at[:B, :n_s].set(
        s.astype(jnp.float32)
    )

    out = pl.pallas_call(
        critic_kernel,
        out_shape=jax.ShapeDtypeStruct((Bp, 1), jnp.float32),
        grid_spec=pltpu.PrefetchScalarGridSpec(
            num_scalar_prefetch=0,
            grid=(Bp // tb,),
            in_specs=[
                pl.BlockSpec((tb, FEAT), lambda i: (i, 0)),     # activations stream
                pl.BlockSpec((FEAT, FEAT), lambda i: (0, 0)),   # w1: VMEM-resident
                pl.BlockSpec((FEAT, FEAT), lambda i: (0, 0)),   # w2: VMEM-resident
                pl.BlockSpec((8, FEAT), lambda i: (0, 0)),      # packed biases + w3
            ],
            out_specs=pl.BlockSpec((tb, 1), lambda i: (i, 0)),
        ),
        compiler_params=pltpu.CompilerParams(
            dimension_semantics=("parallel",),   # shard batch across v7x cores
        ),
    )(s_pad, w1p, w2p, aux)
    return out[:B]


def init_params(key, n_s):
    # Mimics Critic.set_init (normal std=0.1, zero bias) plus the __init__-time
    # fc3 scaling (weight * 0.1, bias * 0.0). Weights stored as (in, out) so the
    # kernel computes x @ W + b == PyTorch's x @ W.T + b.
    k1, k2, k3 = jax.random.split(key, 3)
    w1 = jax.random.normal(k1, (n_s, 64), jnp.float32) * 0.1
    b1 = jnp.zeros((64,), jnp.float32)
    w2 = jax.random.normal(k2, (64, 64), jnp.float32) * 0.1
    b2 = jnp.zeros((64,), jnp.float32)
    w3 = (jax.random.normal(k3, (64, 1), jnp.float32) * 0.1) * 0.1
    b3 = jnp.zeros((1,), jnp.float32)
    return (w1, b1, w2, b2, w3, b3)


def critic_reference(s, params):
    w1, b1, w2, b2, w3, b3 = params
    x = jnp.tanh(s @ w1 + b1)
    x = jnp.tanh(x @ w2 + b2)
    return x @ w3 + b3


if __name__ == "__main__":
    key = jax.random.PRNGKey(0)
    N_S = 11  # Hopper observation dim

    pkey, skey1, skey2 = jax.random.split(key, 3)
    params = init_params(pkey, N_S)
    packed = pack_params(*params)

    # Small batch (single tile, no padding rows).
    s_small = jax.random.normal(skey1, (8, N_S), jnp.float32)
    v_small = critic_forward(s_small, packed)
    jax.block_until_ready(v_small)
    ref_small = critic_reference(s_small, params)
    assert v_small.shape == (8, 1)
    assert jnp.allclose(v_small, ref_small, atol=1e-4, rtol=1e-4)

    # Larger batch: exercises multi-step grid, batch padding and output slicing.
    s_big = jax.random.normal(skey2, (1030, N_S), jnp.float32)
    v_big = critic_forward(s_big, packed)
    jax.block_until_ready(v_big)
    ref_big = critic_reference(s_big, params)
    assert v_big.shape == (1030, 1)
    assert jnp.allclose(v_big, ref_big, atol=1e-4, rtol=1e-4)

    print("KERNEL_OK")
</pallas_src>

<mosaic_0001>
module attributes {stable_mosaic.version = 11 : i64} {
  func.func @critic_kernel(%arg0: i32, %arg1: memref<8x128xf32, #tpu.memory_space<vmem>>, %arg2: memref<128x128xf32, #tpu.memory_space<vmem>>, %arg3: memref<128x128xf32, #tpu.memory_space<vmem>>, %arg4: memref<8x128xf32, #tpu.memory_space<vmem>>, %arg5: memref<8x1xf32, #tpu.memory_space<vmem>>) attributes {dimension_semantics = [#tpu.dimension_semantics<parallel>], iteration_bounds = array<i64: 1>, scalar_prefetch = 0 : i64, scratch_operands = 0 : i64, tpu.core_type = #tpu.core_type<tc>, window_params = [{transform_indices = @transform_0, window_bounds = array<i64: 8, 128>}, {pipeline_mode = #tpu.pipeline_mode<synchronous>, transform_indices = @transform_1, window_bounds = array<i64: 128, 128>}, {pipeline_mode = #tpu.pipeline_mode<synchronous>, transform_indices = @transform_2, window_bounds = array<i64: 128, 128>}, {pipeline_mode = #tpu.pipeline_mode<synchronous>, transform_indices = @transform_3, window_bounds = array<i64: 8, 128>}, {transform_indices = @transform_4, window_bounds = array<i64: 8, 1>}]} {
    %c0 = arith.constant 0 : index
    %c0_0 = arith.constant 0 : index
    %0 = vector.load %arg4[%c0, %c0_0] : memref<8x128xf32, #tpu.memory_space<vmem>>, vector<8x128xf32>
    %1 = vector.extract_strided_slice %0 {offsets = [0, 0], sizes = [1, 128], strides = [1, 1]} : vector<8x128xf32> to vector<1x128xf32>
    %2 = vector.extract_strided_slice %0 {offsets = [1, 0], sizes = [1, 128], strides = [1, 1]} : vector<8x128xf32> to vector<1x128xf32>
    %3 = vector.extract_strided_slice %0 {offsets = [2, 0], sizes = [1, 128], strides = [1, 1]} : vector<8x128xf32> to vector<1x128xf32>
    %4 = vector.extract_strided_slice %0 {offsets = [3, 0], sizes = [1, 1], strides = [1, 1]} : vector<8x128xf32> to vector<1x1xf32>
    %c0_1 = arith.constant 0 : index
    %c0_2 = arith.constant 0 : index
    %5 = vector.load %arg1[%c0_1, %c0_2] : memref<8x128xf32, #tpu.memory_space<vmem>>, vector<8x128xf32>
    %c0_3 = arith.constant 0 : index
    %c0_4 = arith.constant 0 : index
    %6 = vector.load %arg2[%c0_3, %c0_4] : memref<128x128xf32, #tpu.memory_space<vmem>>, vector<128x128xf32>
    %cst = arith.constant dense<0.000000e+00> : vector<8x128xf32>
    %7 = tpu.matmul %5, %6, %cst {dimension_numbers = #tpu.dot_dimension_numbers<[1], [0], [0], [1], [0, 0, 1, 1], [], []>} : vector<8x128xf32>, vector<128x128xf32>, vector<8x128xf32> -> vector<8x128xf32>
    %8 = vector.broadcast %1 : vector<1x128xf32> to vector<8x128xf32>
    %9 = arith.addf %7, %8 : vector<8x128xf32>
    %10 = math.tanh %9 : vector<8x128xf32>
    %c0_5 = arith.constant 0 : index
    %c0_6 = arith.constant 0 : index
    %11 = vector.load %arg3[%c0_5, %c0_6] : memref<128x128xf32, #tpu.memory_space<vmem>>, vector<128x128xf32>
    %cst_7 = arith.constant dense<0.000000e+00> : vector<8x128xf32>
    %12 = tpu.matmul %10, %11, %cst_7 {dimension_numbers = #tpu.dot_dimension_numbers<[1], [0], [0], [1], [0, 0, 1, 1], [], []>} : vector<8x128xf32>, vector<128x128xf32>, vector<8x128xf32> -> vector<8x128xf32>
    %13 = vector.broadcast %2 : vector<1x128xf32> to vector<8x128xf32>
    %14 = arith.addf %12, %13 : vector<8x128xf32>
    %15 = math.tanh %14 : vector<8x128xf32>
    %16 = vector.broadcast %3 : vector<1x128xf32> to vector<8x128xf32>
    %17 = arith.mulf %15, %16 : vector<8x128xf32>
    %cst_8 = arith.constant dense<0.000000e+00> : vector<8xf32>
    %18 = vector.multi_reduction <add>, %17, %cst_8 [1] : vector<8x128xf32> to vector<8xf32>
    %19 = vector.shape_cast %18 : vector<8xf32> to vector<8x1xf32>
    %20 = vector.broadcast %4 : vector<1x1xf32> to vector<8x1xf32>
    %21 = arith.addf %19, %20 : vector<8x1xf32>
    %c0_9 = arith.constant 0 : index
    %c0_10 = arith.constant 0 : index
    %22 = vector.load %arg5[%c0_9, %c0_10] : memref<8x1xf32, #tpu.memory_space<vmem>>, vector<8x1xf32>
    tpu.vector_store %arg5[%c0_9, %c0_10], %21 {strides = array<i32>} : memref<8x1xf32, #tpu.memory_space<vmem>>, vector<8x1xf32>,
    return
  }
  func.func @transform_0(%arg0: i32) -> (i32, i32) {
    %c0_i32 = arith.constant 0 : i32
    %c0_i32_0 = arith.constant 0 : i32
    return %arg0, %c0_i32 : i32, i32
  }
  func.func @transform_1(%arg0: i32) -> (i32, i32) {
    %c0_i32 = arith.constant 0 : i32
    %c0_i32_0 = arith.constant 0 : i32
    %c0_i32_1 = arith.constant 0 : i32
    return %c0_i32, %c0_i32_0 : i32, i32
  }
  func.func @transform_2(%arg0: i32) -> (i32, i32) {
    %c0_i32 = arith.constant 0 : i32
    %c0_i32_0 = arith.constant 0 : i32
    %c0_i32_1 = arith.constant 0 : i32
    return %c0_i32, %c0_i32_0 : i32, i32
  }
  func.func @transform_3(%arg0: i32) -> (i32, i32) {
    %c0_i32 = arith.constant 0 : i32
    %c0_i32_0 = arith.constant 0 : i32
    %c0_i32_1 = arith.constant 0 : i32
    return %c0_i32, %c0_i32_0 : i32, i32
  }
  func.func @transform_4(%arg0: i32) -> (i32, i32) {
    %c0_i32 = arith.constant 0 : i32
    %c0_i32_0 = arith.constant 0 : i32
    return %arg0, %c0_i32 : i32, i32
  }
}

</mosaic_0001>

<llo_original>
// kernel: tpu_custom_call.1
$region0: #{tpu_custom_call.1}
  #allocation0 [shape = 'u32[]', space=smem, size = 0x4, offset = 0x4, fixed_abs, tag = 'smem constant byte address 0x4 - core index']
  #allocation1 [shape = 'u32[144,128]{1,0:T(1,128)}', space=vmem, size = 0x12000, scoped, tag = 'internal scratch']
  %s0 = inlined_call_operand.hbm [shape: f32[8,128], index: 0, kind: input, shape index: {}]
  %s1 = inlined_call_operand.hbm [shape: f32[128,128], index: 1, kind: input, shape index: {}]
  %s2 = inlined_call_operand.hbm [shape: f32[128,128], index: 2, kind: input, shape index: {}]
  %s3 = inlined_call_operand.vmem [shape: f32[8,128], index: 3, kind: input, shape index: {}]
  %s4 = inlined_call_operand.vmem [shape: f32[8,1], index: 4, kind: output, shape index: {}]
  %s5 = sld [smem:[#allocation0]]
  $region38: #{tpu_custom_call.1} parent=0
    _
  %s7 = ssub.s32 1, %s5
  %s8 = scalar_select 0, %s7, %s5
  $region1: #{tpu_custom_call.1} parent=0
    #allocation2 [shape = 'u8[4096]{0}', space=vmem, size = 0x1000, scoped, tag = 'input window, operand 0, single buffered']
    #allocation3 [shape = 's32[1]{0}', space=sflag, size = 0x4, scoped, tag = 'scoped memory for tpu_custom_call.1']
    #allocation4 [shape = 'u8[65536]{0}', space=vmem, size = 0x10000, scoped, tag = 'input window, operand 1, single buffered']
    #allocation5 [shape = 's32[1]{0}', space=sflag, size = 0x4, scoped, tag = 'scoped memory for tpu_custom_call.1']
    #allocation6 [shape = 'u8[65536]{0}', space=vmem, size = 0x10000, scoped, tag = 'input window, operand 2, single buffered']
    %9 = vsyncpa [#allocation3], 0
    %10 = vsyncpa [#allocation5], 0
    // Predicated region
    $region2: #{tpu_custom_call.1} parent=1 // pred_check
      _
    $region3: #{tpu_custom_call.1} parent=1 // pred_check_branch
      %12 = sbr.rel (0) target = $region5
    $region4: #{tpu_custom_call.1} parent=1 // pred_region
      %s14 = ssub.s32 128, 128
      %15 = vsyncadd [#allocation3], %s14
      %s17 = sshll.u32 [#allocation2], 4
      %s18 = int_to_ptr.vmem [resolvable:$true] %s17
      %20 = dma.hbm_to_vmem [thread:$0]  %s0, 128, %s18, [#allocation3]
    $region5: #{tpu_custom_call.1} parent=1 // pred_fallthru
      _
    // Predicated region
    $region6: #{tpu_custom_call.1} parent=1 // pred_check
      _
    $region7: #{tpu_custom_call.1} parent=1 // pred_check_branch
      %22 = sbr.rel (0) target = $region9
    $region8: #{tpu_custom_call.1} parent=1 // pred_region
      %s24 = ssub.s32 2048, 2048
      %25 = vsyncadd [#allocation5], %s24
      %s26 = sshll.u32 [#allocation4], 4
      %s27 = int_to_ptr.vmem [resolvable:$true] %s26
      %32 = dma.hbm_to_vmem [thread:$0]  %s1, 2048, %s27, [#allocation5], 128, 128, 8
    $region9: #{tpu_custom_call.1} parent=1 // pred_fallthru
      _
    // Predicated region
    $region10: #{tpu_custom_call.1} parent=1 // pred_check
      _
    $region11: #{tpu_custom_call.1} parent=1 // pred_check_branch
      %34 = sbr.rel (0) target = $region13
    $region12: #{tpu_custom_call.1} parent=1 // pred_region
      %s36 = ssub.s32 2048, 2048
      %37 = vsyncadd [#allocation5], %s36
      %s38 = sshll.u32 [#allocation6], 4
      %s39 = int_to_ptr.vmem [resolvable:$true] %s38
      %44 = dma.hbm_to_vmem [thread:$0]  %s2, 2048, %s39, [#allocation5], 128, 128, 8
    $region13: #{tpu_custom_call.1} parent=1 // pred_fallthru
      _
    // Predicated region
    $region14: #{tpu_custom_call.1} parent=1 // pred_check
      _
    $region15: #{tpu_custom_call.1} parent=1 // pred_check_branch
      %46 = sbr.rel (0) target = $region17
    $region16: #{tpu_custom_call.1} parent=1 // pred_region
      _
    $region17: #{tpu_custom_call.1} parent=1 // pred_fallthru
      _
    // Predicated region
    $region18: #{tpu_custom_call.1} parent=1 // pred_check
      _
    $region19: #{tpu_custom_call.1} parent=1 // pred_check_branch
      %48 = sbr.rel (0) target = $region21
    $region20: #{tpu_custom_call.1} parent=1 // pred_region
      %49 = dma.done [#allocation3], 128
    $region21: #{tpu_custom_call.1} parent=1 // pred_fallthru
      _
    // Predicated region
    $region22: #{tpu_custom_call.1} parent=1 // pred_check
      _
    $region23: #{tpu_custom_call.1} parent=1 // pred_check_branch
      %51 = sbr.rel (0) target = $region25
    $region24: #{tpu_custom_call.1} parent=1 // pred_region
      %52 = dma.done [#allocation5], 2048
    $region25: #{tpu_custom_call.1} parent=1 // pred_fallthru
      _
    // Predicated region
    $region26: #{tpu_custom_call.1} parent=1 // pred_check
      _
    $region27: #{tpu_custom_call.1} parent=1 // pred_check_branch
      %54 = sbr.rel (0) target = $region29
    $region28: #{tpu_custom_call.1} parent=1 // pred_region
      %55 = dma.done [#allocation5], 2048
    $region29: #{tpu_custom_call.1} parent=1 // pred_fallthru
      _
    %v56 = vld [vmem:[%s3] sm:$0xff]
    %v57 = vld [vmem:[#allocation2] sm:$0xff]
    %v58 = vld [vmem:[#allocation4] sm:$0xff]
    %v59 = vld [vmem:[#allocation4 + $0x8] sm:$0xff]
    %v60 = vld [vmem:[#allocation4 + $0x10] sm:$0xff]
    %v61 = vld [vmem:[#allocation4 + $0x18] sm:$0xff]
    %v62 = vld [vmem:[#allocation4 + $0x20] sm:$0xff]
    %v63 = vld [vmem:[#allocation4 + $0x28] sm:$0xff]
    %v64 = vld [vmem:[#allocation4 + $0x30] sm:$0xff]
    %v65 = vld [vmem:[#allocation4 + $0x38] sm:$0xff]
    %v66 = vld [vmem:[#allocation4 + $0x40] sm:$0xff]
    %v67 = vld [vmem:[#allocation4 + $0x48] sm:$0xff]
    %v68 = vld [vmem:[#allocation4 + $0x50] sm:$0xff]
    %v69 = vld [vmem:[#allocation4 + $0x58] sm:$0xff]
    %v70 = vld [vmem:[#allocation4 + $0x60] sm:$0xff]
    %v71 = vld [vmem:[#allocation4 + $0x68] sm:$0xff]
    %v72 = vld [vmem:[#allocation4 + $0x70] sm:$0xff]
    %v73 = vld [vmem:[#allocation4 + $0x78] sm:$0xff]
    %v74 = vlaneseq
    %v75 = vshrl.u32 %v74, 7
    %v76 = vsub.s32 0, %v75
    %v77 = vrot.slane %v56, %v76
    %78 = vmatprep.subr.mxu0 0.0
    %79 = vmatpush1.msra.mxu0 %v58
    %80 = vmatprep.subr.mxu0 0.0
    %81 = vmatpush1.msra.mxu0 %v59
    %82 = vmatprep.subr.mxu0 0.0
    %83 = vmatpush1.msra.mxu0 %v60
    %84 = vmatprep.subr.mxu0 0.0
    %85 = vmatpush1.msra.mxu0 %v61
    %86 = vmatprep.subr.mxu0 0.0
    %87 = vmatpush1.msra.mxu0 %v62
    %88 = vmatprep.subr.mxu0 0.0
    %89 = vmatpush1.msra.mxu0 %v63
    %90 = vmatprep.subr.mxu0 0.0
    %91 = vmatpush1.msra.mxu0 %v64
    %92 = vmatprep.subr.mxu0 0.0
    %93 = vmatpush1.msra.mxu0 %v65
    %94 = vmatprep.subr.mxu0 0.0
    %95 = vmatpush1.msra.mxu0 %v66
    %96 = vmatprep.subr.mxu0 0.0
    %97 = vmatpush1.msra.mxu0 %v67
    %98 = vmatprep.subr.mxu0 0.0
    %99 = vmatpush1.msra.mxu0 %v68
    %100 = vmatprep.subr.mxu0 0.0
    %101 = vmatpush1.msra.mxu0 %v69
    %102 = vmatprep.subr.mxu0 0.0
    %103 = vmatpush1.msra.mxu0 %v70
    %104 = vmatprep.subr.mxu0 0.0
    %105 = vmatpush1.msra.mxu0 %v71
    %106 = vmatprep.subr.mxu0 0.0
    %107 = vmatpush1.msra.mxu0 %v72
    %108 = vmatprep.subr.mxu0 0.0
    %109 = vmatpush1.msra.mxu0 %v73
    %110 = vmatprep.subr.mxu0 0.0
    %111 = vmatpush1.msra.mxu0 0.0
    %112 = vmatprep.subr.mxu0 0.0
    %113 = vmatpush1.msra.mxu0 0.0
    %114 = vmatprep.subr.mxu0 0.0
    %115 = vmatpush1.msra.mxu0 0.0
    %116 = vmatprep.subr.mxu0 0.0
    %117 = vmatpush1.msra.mxu0 0.0
    %118 = vmatprep.subr.mxu0 0.0
    %119 = vmatpush1.msra.mxu0 0.0
    %120 = vmatprep.subr.mxu0 0.0
    %121 = vmatpush1.msra.mxu0 0.0
    %122 = vmatprep.subr.mxu0 0.0
    %123 = vmatpush1.msra.mxu0 0.0
    %124 = vmatprep.subr.mxu0 0.0
    %125 = vmatpush1.msra.mxu0 0.0
    %126 = vmatprep.subr.mxu0 0.0
    %127 = vmatpush1.msra.mxu0 0.0
    %128 = vmatprep.subr.mxu0 0.0
    %129 = vmatpush1.msra.mxu0 0.0
    %130 = vmatprep.subr.mxu0 0.0
    %131 = vmatpush1.msra.mxu0 0.0
    %132 = vmatprep.subr.mxu0 0.0
    %133 = vmatpush1.msra.mxu0 0.0
    %134 = vmatprep.subr.mxu0 0.0
    %135 = vmatpush1.msra.mxu0 0.0
    %136 = vmatprep.subr.mxu0 0.0
    %137 = vmatpush1.msra.mxu0 0.0
    %138 = vmatprep.subr.mxu0 0.0
    %139 = vmatpush1.msra.mxu0 0.0
    %140 = vmatprep.subr.mxu0 0.0
    %141 = vmatpush1.msra.mxu0 0.0
    %142 = vmatprep.mubr.f32.mxu0 0.0
    %143 = vmatmul.mubr.f32.gmra.mrb[0].mxu0 %v57
    %v144 = vpop.f32.mrb[0].mxu0
    %v145 = vadd.f32 %v77, %v144
    %v146 = vpop.f32.mrb[0].mxu0
    %147 = vdwg.mxu0
    %v148 = vtanh.pop %v145
    %v149 = vld [vmem:[#allocation6] sm:$0xff]
    %v150 = vld [vmem:[#allocation6 + $0x8] sm:$0xff]
    %v151 = vld [vmem:[#allocation6 + $0x10] sm:$0xff]
    %v152 = vld [vmem:[#allocation6 + $0x18] sm:$0xff]
    %v153 = vld [vmem:[#allocation6 + $0x20] sm:$0xff]
    %v154 = vld [vmem:[#allocation6 + $0x28] sm:$0xff]
    %v155 = vld [vmem:[#allocation6 + $0x30] sm:$0xff]
    %v156 = vld [vmem:[#allocation6 + $0x38] sm:$0xff]
    %v157 = vld [vmem:[#allocation6 + $0x40] sm:$0xff]
    %v158 = vld [vmem:[#allocation6 + $0x48] sm:$0xff]
    %v159 = vld [vmem:[#allocation6 + $0x50] sm:$0xff]
    %v160 = vld [vmem:[#allocation6 + $0x58] sm:$0xff]
    %v161 = vld [vmem:[#allocation6 + $0x60] sm:$0xff]
    %v162 = vld [vmem:[#allocation6 + $0x68] sm:$0xff]
    %v163 = vld [vmem:[#allocation6 + $0x70] sm:$0xff]
    %v164 = vld [vmem:[#allocation6 + $0x78] sm:$0xff]
    %v165 = vlaneseq
    %v166 = vshrl.u32 %v165, 7
    %v167 = vsub.s32 1, %v166
    %v168 = vrot.slane %v56, %v167
    %169 = vmatprep.subr.mxu0 0.0
    %170 = vmatpush1.msra.mxu0 %v149
    %171 = vmatprep.subr.mxu0 0.0
    %172 = vmatpush1.msra.mxu0 %v150
    %173 = vmatprep.subr.mxu0 0.0
    %174 = vmatpush1.msra.mxu0 %v151
    %175 = vmatprep.subr.mxu0 0.0
    %176 = vmatpush1.msra.mxu0 %v152
    %177 = vmatprep.subr.mxu0 0.0
    %178 = vmatpush1.msra.mxu0 %v153
    %179 = vmatprep.subr.mxu0 0.0
    %180 = vmatpush1.msra.mxu0 %v154
    %181 = vmatprep.subr.mxu0 0.0
    %182 = vmatpush1.msra.mxu0 %v155
    %183 = vmatprep.subr.mxu0 0.0
    %184 = vmatpush1.msra.mxu0 %v156
    %185 = vmatprep.subr.mxu0 0.0
    %186 = vmatpush1.msra.mxu0 %v157
    %187 = vmatprep.subr.mxu0 0.0
    %188 = vmatpush1.msra.mxu0 %v158
    %189 = vmatprep.subr.mxu0 0.0
    %190 = vmatpush1.msra.mxu0 %v159
    %191 = vmatprep.subr.mxu0 0.0
    %192 = vmatpush1.msra.mxu0 %v160
    %193 = vmatprep.subr.mxu0 0.0
    %194 = vmatpush1.msra.mxu0 %v161
    %195 = vmatprep.subr.mxu0 0.0
    %196 = vmatpush1.msra.mxu0 %v162
    %197 = vmatprep.subr.mxu0 0.0
    %198 = vmatpush1.msra.mxu0 %v163
    %199 = vmatprep.subr.mxu0 0.0
    %200 = vmatpush1.msra.mxu0 %v164
    %201 = vmatprep.subr.mxu0 0.0
    %202 = vmatpush1.msra.mxu0 0.0
    %203 = vmatprep.subr.mxu0 0.0
    %204 = vmatpush1.msra.mxu0 0.0
    %205 = vmatprep.subr.mxu0 0.0
    %206 = vmatpush1.msra.mxu0 0.0
    %207 = vmatprep.subr.mxu0 0.0
    %208 = vmatpush1.msra.mxu0 0.0
    %209 = vmatprep.subr.mxu0 0.0
    %210 = vmatpush1.msra.mxu0 0.0
    %211 = vmatprep.subr.mxu0 0.0
    %212 = vmatpush1.msra.mxu0 0.0
    %213 = vmatprep.subr.mxu0 0.0
    %214 = vmatpush1.msra.mxu0 0.0
    %215 = vmatprep.subr.mxu0 0.0
    %216 = vmatpush1.msra.mxu0 0.0
    %217 = vmatprep.subr.mxu0 0.0
    %218 = vmatpush1.msra.mxu0 0.0
    %219 = vmatprep.subr.mxu0 0.0
    %220 = vmatpush1.msra.mxu0 0.0
    %221 = vmatprep.subr.mxu0 0.0
    %222 = vmatpush1.msra.mxu0 0.0
    %223 = vmatprep.subr.mxu0 0.0
    %224 = vmatpush1.msra.mxu0 0.0
    %225 = vmatprep.subr.mxu0 0.0
    %226 = vmatpush1.msra.mxu0 0.0
    %227 = vmatprep.subr.mxu0 0.0
    %228 = vmatpush1.msra.mxu0 0.0
    %229 = vmatprep.subr.mxu0 0.0
    %230 = vmatpush1.msra.mxu0 0.0
    %231 = vmatprep.subr.mxu0 0.0
    %232 = vmatpush1.msra.mxu0 0.0
    %233 = vmatprep.mubr.f32.mxu0 0.0
    %234 = vmatmul.mubr.f32.gmra.mrb[0].mxu0 %v148
    %v235 = vpop.f32.mrb[0].mxu0
    %v236 = vadd.f32 %v168, %v235
    %v237 = vpop.f32.mrb[0].mxu0
    %238 = vdwg.mxu0
    %v239 = vtanh.pop %v236
    %v240 = vlaneseq
    %v241 = vshrl.u32 %v240, 7
    %v242 = vsub.s32 2, %v241
    %v243 = vrot.slane %v56, %v242
    %v244 = vmul.f32 %v239, %v243
    %245 = vadd.xlane.f32.xlu0 %v244
    %v246 = vpop.xlane.xlu0 %245
    %v247 = vlaneseq
    %v248 = vshrl.u32 %v247, 7
    %v249 = vsub.s32 3, %v248
    %v250 = vrot.slane %v56, %v249
    %v251 = vadd.f32 %v246, %v250
    %vm252 = vcmask 7168
    %253 = vst.msk [vmem:[%s4] sm:$0xff] %vm252, %v251
    // Predicated region
    $region30: #{tpu_custom_call.1} parent=1 // pred_check
      _
    $region31: #{tpu_custom_call.1} parent=1 // pred_check_branch
      %255 = sbr.rel (0) target = $region33
    $region32: #{tpu_custom_call.1} parent=1 // pred_region
      _
    $region33: #{tpu_custom_call.1} parent=1 // pred_fallthru
      _
    // Predicated region
    $region34: #{tpu_custom_call.1} parent=1 // pred_check
      _
    $region35: #{tpu_custom_call.1} parent=1 // pred_check_branch
      %257 = sbr.rel (0) target = $region37
    $region36: #{tpu_custom_call.1} parent=1 // pred_region
      _
    $region37: #{tpu_custom_call.1} parent=1 // pred_fallthru
      _
    %258 = vsyncpa [#allocation3], 1
    %259 = vsyncpa [#allocation5], 1

</llo_original>
